<compile_context>
chip_gen: v7x
topology: tpu7x:2x2x1
jax: 0.10.0
libtpu: 0.0.40
codegen_flags: <defaults>
</compile_context>

<pallas_src>
import numpy as np
import jax
import jax.numpy as jnp
from jax.experimental import pallas as pl
from jax.experimental.pallas import tpu as pltpu

_SQRT2_INV = 1.0 / np.sqrt(2.0)

_TARGET_BLOCK_BYTES = 4 << 20    # ~4 MiB of VMEM blocks per grid step (in + out)
_VMEM_BUDGET_BYTES = 24 << 20    # double-buffered blocks must stay under this


def haar_dec_filters():
    """(4, 2, 2) Haar analysis bank [k, di, dj] matching the PyTorch module (pywt 'haar')."""
    dec_lo = np.array([_SQRT2_INV, _SQRT2_INV], dtype=np.float32)[::-1]   # torch reverses taps
    dec_hi = np.array([-_SQRT2_INV, _SQRT2_INV], dtype=np.float32)[::-1]
    return np.stack(
        [dec_lo[None, :] * dec_lo[:, None],   # LL
         dec_lo[None, :] * dec_hi[:, None],   # LH
         dec_hi[None, :] * dec_lo[:, None],   # HL
         dec_hi[None, :] * dec_hi[:, None]],  # HH
        axis=0,
    ).astype(np.float32)


# ----------------------------------------------------------------------------------
# Kernels
# ----------------------------------------------------------------------------------

def _haar_band_kernel(p_ref, o_ref):
    """Fast path: one Haar band per grid step.

    p_ref: (4, TB, TL) decimated planes [x00, x01, x10, x11] (band-major leading dim).
    o_ref: (TB, TL) dense tile holding band pl.program_id(2) of [LL, LH, HL, HH]
           (already includes the module's final /2 => +/-0.25 coefficients).
    """
    k = pl.program_id(2)
    one = jnp.float32(1.0)
    col_sign = jnp.where(k < 2, one, -one)          # + for LL/LH, - for HL/HH
    row_sign = jnp.where((k % 2) == 0, one, -one)   # + for LL/HL, - for LH/HH

    f32 = jnp.float32
    p00 = p_ref[0].astype(f32)
    p01 = p_ref[1].astype(f32)
    p10 = p_ref[2].astype(f32)
    p11 = p_ref[3].astype(f32)

    r0 = p00 + col_sign * p01
    r1 = p10 + col_sign * p11
    o_ref[...] = (0.25 * (r0 + row_sign * r1)).astype(o_ref.dtype)


def _haar_all_bands_kernel(p_ref, o_ref):
    """Fallback path: all four bands in one step (lifting form, 8 adds + 4 muls).

    p_ref: (4, TB, L) planes [x00, x01, x10, x11]; o_ref: (TB, 4, L) bands [LL, LH, HL, HH].
    """
    f32 = jnp.float32
    p00 = p_ref[0].astype(f32)
    p01 = p_ref[1].astype(f32)
    p10 = p_ref[2].astype(f32)
    p11 = p_ref[3].astype(f32)

    s0 = p00 + p01            # row-0 sum
    d0 = p00 - p01            # row-0 diff
    s1 = p10 + p11            # row-1 sum
    d1 = p10 - p11            # row-1 diff

    dt = o_ref.dtype
    o_ref[:, 0, :] = (0.25 * (s0 + s1)).astype(dt)   # LL
    o_ref[:, 1, :] = (0.25 * (s0 - s1)).astype(dt)   # LH
    o_ref[:, 2, :] = (0.25 * (d0 + d1)).astype(dt)   # HL
    o_ref[:, 3, :] = (0.25 * (d0 - d1)).astype(dt)   # HH


# ----------------------------------------------------------------------------------
# Tiling helpers
# ----------------------------------------------------------------------------------

def _pad_to(v, m):
    return -(-v // m) * m


def _divisors(n):
    ds = set()
    i = 1
    while i * i <= n:
        if n % i == 0:
            ds.add(i)
            ds.add(n // i)
        i += 1
    return sorted(ds)


def _sublane_multiple(dtype):
    itemsize = jnp.dtype(dtype).itemsize
    return max(8, 32 // max(itemsize, 1))     # f32 -> 8, bf16 -> 16, int8/fp8 -> 32


def _batch_tile_candidates(B, sub_mult):
    # The batch dim sits on sublanes in the blocks -> must be a multiple of the sublane
    # tile or the full B (the (8,128)-or-full-dim BlockSpec rule).
    return sorted(set(d for d in _divisors(B) if d % sub_mult == 0) | {B})


# ----------------------------------------------------------------------------------
# pallas_call drivers
# ----------------------------------------------------------------------------------

def _haar_pallas_banded(planes, B, L, dtype):
    """Fast path.  planes: (4, B, L) with L % 128 == 0.  Returns (B, 4*L)."""
    isz = jnp.dtype(dtype).itemsize
    sub = _sublane_multiple(dtype)
    tb_cands = _batch_tile_candidates(B, sub)
    tl_cands = [d for d in _divisors(L) if d % 128 == 0]

    def blk_bytes(tb, tl):
        # (4, TB, TL) input block + one dense (TB, TL) output block, as tiled in VMEM.
        return 5 * _pad_to(tb, sub) * tl * isz

    tb = tb_cands[0]
    fitting = [d for d in tl_cands if blk_bytes(tb, d) <= _TARGET_BLOCK_BYTES]
    tl = max(fitting) if fitting else min(tl_cands)
    for d in tb_cands:
        if blk_bytes(d, tl) <= _TARGET_BLOCK_BYTES and 2 * blk_bytes(d, tl) <= _VMEM_BUDGET_BYTES:
            tb = max(tb, d)

    n_b, n_l = B // tb, L // tl
    vmem_limit = max(32 << 20, 2 * blk_bytes(tb, tl) + (8 << 20))

    return pl.pallas_call(
        _haar_band_kernel,
        out_shape=jax.ShapeDtypeStruct((B, 4 * L), dtype),
        grid=(n_b, n_l, 4),
        in_specs=[pl.BlockSpec((4, tb, tl), lambda b, l, k: (0, b, l))],
        out_specs=pl.BlockSpec((tb, tl), lambda b, l, k: (b, k * n_l + l)),
        compiler_params=pltpu.CompilerParams(
            # b / l steps are independent (megacore); the band axis is innermost and
            # "arbitrary" so the input block (constant across it) is fetched once per
            # (b, l) and only the small dense output tile changes per step.
            dimension_semantics=("parallel", "parallel", "arbitrary"),
            vmem_limit_bytes=vmem_limit,
        ),
    )(planes)


def _haar_pallas_full(planes, B, L, dtype):
    """Fallback (L not a multiple of 128): whole lane span per block, 4 bands per step.

    planes: (4, B, L).  Returns (B, 4, L).
    """
    isz = jnp.dtype(dtype).itemsize
    sub = _sublane_multiple(dtype)
    padL = _pad_to(L, 128)
    tb_cands = _batch_tile_candidates(B, sub)

    def blk_bytes(tb):
        inb = 4 * _pad_to(tb, sub) * padL * isz           # (4, TB, L) block
        outb = tb * _pad_to(4, sub) * padL * isz          # (TB, 4, L) block
        return inb + outb

    tb = tb_cands[0]
    for d in tb_cands:
        if blk_bytes(d) <= _TARGET_BLOCK_BYTES and 2 * blk_bytes(d) <= _VMEM_BUDGET_BYTES:
            tb = max(tb, d)
    # Keep >= 2 grid steps for megacore when the batch dim allows it.
    if B // tb < 2:
        for d in reversed(tb_cands):
            if d < tb and B // d >= 2:
                tb = d
                break

    vmem_limit = max(32 << 20, 2 * blk_bytes(tb) + (8 << 20))

    return pl.pallas_call(
        _haar_all_bands_kernel,
        out_shape=jax.ShapeDtypeStruct((B, 4, L), dtype),
        grid=(B // tb,),
        in_specs=[pl.BlockSpec((4, tb, L), lambda b: (0, b, 0))],
        out_specs=pl.BlockSpec((tb, 4, L), lambda b: (b, 0, 0)),
        compiler_params=pltpu.CompilerParams(
            dimension_semantics=("parallel",),
            vmem_limit_bytes=vmem_limit,
        ),
    )(planes)


# ----------------------------------------------------------------------------------
# Public forward
# ----------------------------------------------------------------------------------

def wavelet_decomp_forward(x, stride=2):
    """Pallas TPU implementation of waveletDecomp.forward (stride 2 or 1)."""
    N, C, H, W = x.shape
    if stride == 2:
        # F.conv2d(stride=2, padding=0) with a 2x2 kernel: VALID conv, floor(H/2) x floor(W/2).
        H2, W2 = (H // 2) * 2, (W // 2) * 2
        Ho, Wo = H2 // 2, W2 // 2
        xb = x[:, :, :H2, :W2].reshape(N * C, H2, W2)
        planes = [xb[:, di::2, dj::2] for di in (0, 1) for dj in (0, 1)]
    elif stride == 1:
        # Replicate pad (left 0, right 1, top 0, bottom 1), then a 2x2 VALID stride-1 conv.
        Ho, Wo = H, W
        xb = x.reshape(N * C, H, W)
        xp = jnp.pad(xb, ((0, 0), (0, 1), (0, 1)), mode="edge")
        planes = [xp[:, di:di + H, dj:dj + W] for di in (0, 1) for dj in (0, 1)]
    else:
        raise NotImplementedError("waveletDecomp.forward supports stride in {1, 2}")

    B, L = N * C, Ho * Wo
    dtype = x.dtype
    # One fused XLA pass: strided-slice deinterleave + stack -> (4, B, L) band-major planes.
    patches = jnp.stack([p.reshape(B, L) for p in planes], axis=0)

    if L % 128 == 0:
        out_flat = _haar_pallas_banded(patches, B, L, dtype)            # (B, 4*L)
        return out_flat.reshape(N, 4 * C, Ho, Wo)

    sub = _sublane_multiple(dtype)
    isz = jnp.dtype(dtype).itemsize
    padL = _pad_to(L, 128)
    tb_min = _batch_tile_candidates(B, sub)[0]
    min_blk = (4 * _pad_to(tb_min, sub) + tb_min * _pad_to(4, sub)) * padL * isz
    if 2 * min_blk <= _VMEM_BUDGET_BYTES:
        out = _haar_pallas_full(patches, B, L, dtype)                   # (B, 4, L)
        return out.reshape(N, 4 * C, Ho, Wo)

    # Rare: large spatial extent that is not a multiple of 128 -- pad the flattened lane
    # axis so it becomes splittable, run the banded path, then crop the padding.
    Lp = padL
    patches = jnp.pad(patches, ((0, 0), (0, 0), (0, Lp - L)))
    out_flat = _haar_pallas_banded(patches, B, Lp, dtype)               # (B, 4*Lp)
    out = out_flat.reshape(B, 4, Lp)[:, :, :L]
    return out.reshape(N, 4 * C, Ho, Wo)


# ----------------------------------------------------------------------------------
# Reference + self-test
# ----------------------------------------------------------------------------------

def _reference_forward(x, filt_kij, stride=2):
    """Independent reference mirroring the PyTorch loop (per-channel conv2d, /2)."""
    if stride == 1:
        x = jnp.pad(x, ((0, 0), (0, 0), (0, 1), (0, 1)), mode="edge")
    outs = []
    for i in range(x.shape[1]):
        o = jax.lax.conv_general_dilated(
            x[:, i:i + 1],
            filt_kij[:, None, :, :],              # (4, 1, 2, 2) OIHW
            window_strides=(stride, stride),
            padding="VALID",
            dimension_numbers=("NCHW", "OIHW", "NCHW"),
            precision=jax.lax.Precision.HIGHEST,
        )
        outs.append(o)
    return jnp.concatenate(outs, axis=1) / 2.0


if __name__ == "__main__":
    k0, k1 = jax.random.split(jax.random.PRNGKey(0))
    filt = jnp.asarray(haar_dec_filters())

    # Small shape (L = 64): exercises the full-lane-span fallback path.
    x = jax.random.normal(k0, (2, 4, 16, 16), dtype=jnp.float32)
    y = jax.block_until_ready(wavelet_decomp_forward(x, stride=2))
    y_ref = _reference_forward(x, filt, stride=2)
    assert y.shape == (2, 16, 8, 8), y.shape
    if not np.allclose(np.asarray(y), np.asarray(y_ref), atol=1e-5, rtol=1e-5):
        raise AssertionError("stride-2 Pallas output does not match the reference conv")

    # Lane-dense shape (L = 128): exercises the banded fast path.
    x2 = jax.random.normal(k1, (1, 2, 32, 16), dtype=jnp.float32)
    y2 = jax.block_until_ready(wavelet_decomp_forward(x2, stride=2))
    y2_ref = _reference_forward(x2, filt, stride=2)
    assert y2.shape == (1, 8, 16, 8), y2.shape
    if not np.allclose(np.asarray(y2), np.asarray(y2_ref), atol=1e-5, rtol=1e-5):
        raise AssertionError("banded-path Pallas output does not match the reference conv")

    # stride=1 path (replicate pad + stride-1 conv), L = 256 -> fast path.
    y3 = jax.block_until_ready(wavelet_decomp_forward(x, stride=1))
    y3_ref = _reference_forward(x, filt, stride=1)
    assert y3.shape == (2, 16, 16, 16), y3.shape
    if not np.allclose(np.asarray(y3), np.asarray(y3_ref), atol=1e-5, rtol=1e-5):
        raise AssertionError("stride-1 Pallas output does not match the reference conv")

    print("KERNEL_OK")
</pallas_src>

<mosaic_0001>
module attributes {stable_mosaic.version = 11 : i64} {
  func.func @_haar_all_bands_kernel(%arg0: i32, %arg1: memref<4x8x64xf32, #tpu.memory_space<vmem>>, %arg2: memref<8x4x64xf32, #tpu.memory_space<vmem>>) attributes {dimension_semantics = [#tpu.dimension_semantics<parallel>], iteration_bounds = array<i64: 1>, scalar_prefetch = 0 : i64, scratch_operands = 0 : i64, tpu.core_type = #tpu.core_type<tc>, window_params = [{transform_indices = @transform_0, window_bounds = array<i64: 4, 8, 64>}, {transform_indices = @transform_1, window_bounds = array<i64: 8, 4, 64>}]} {
    %c0 = arith.constant 0 : index
    %c0_0 = arith.constant 0 : index
    %c0_1 = arith.constant 0 : index
    %0 = vector.load %arg1[%c0, %c0_0, %c0_1] : memref<4x8x64xf32, #tpu.memory_space<vmem>>, vector<1x8x64xf32>
    %1 = vector.shape_cast %0 : vector<1x8x64xf32> to vector<8x64xf32>
    %c1 = arith.constant 1 : index
    %c0_2 = arith.constant 0 : index
    %c0_3 = arith.constant 0 : index
    %2 = vector.load %arg1[%c1, %c0_2, %c0_3] : memref<4x8x64xf32, #tpu.memory_space<vmem>>, vector<1x8x64xf32>
    %3 = vector.shape_cast %2 : vector<1x8x64xf32> to vector<8x64xf32>
    %c2 = arith.constant 2 : index
    %c0_4 = arith.constant 0 : index
    %c0_5 = arith.constant 0 : index
    %4 = vector.load %arg1[%c2, %c0_4, %c0_5] : memref<4x8x64xf32, #tpu.memory_space<vmem>>, vector<1x8x64xf32>
    %5 = vector.shape_cast %4 : vector<1x8x64xf32> to vector<8x64xf32>
    %c3 = arith.constant 3 : index
    %c0_6 = arith.constant 0 : index
    %c0_7 = arith.constant 0 : index
    %6 = vector.load %arg1[%c3, %c0_6, %c0_7] : memref<4x8x64xf32, #tpu.memory_space<vmem>>, vector<1x8x64xf32>
    %7 = vector.shape_cast %6 : vector<1x8x64xf32> to vector<8x64xf32>
    %8 = arith.addf %1, %3 : vector<8x64xf32>
    %9 = arith.subf %1, %3 : vector<8x64xf32>
    %10 = arith.addf %5, %7 : vector<8x64xf32>
    %11 = arith.subf %5, %7 : vector<8x64xf32>
    %12 = arith.addf %8, %10 : vector<8x64xf32>
    %cst = arith.constant 2.500000e-01 : f32
    %13 = vector.broadcast %cst : f32 to vector<8x64xf32>
    %14 = arith.mulf %13, %12 : vector<8x64xf32>
    %c0_8 = arith.constant 0 : index
    %c0_9 = arith.constant 0 : index
    %c0_10 = arith.constant 0 : index
    %15 = vector.load %arg2[%c0_8, %c0_9, %c0_10] : memref<8x4x64xf32, #tpu.memory_space<vmem>>, vector<8x1x64xf32>
    %16 = vector.shape_cast %15 : vector<8x1x64xf32> to vector<8x64xf32>
    %17 = vector.shape_cast %14 : vector<8x64xf32> to vector<8x1x64xf32>
    tpu.vector_store %arg2[%c0_8, %c0_9, %c0_10], %17 {strides = array<i32>} : memref<8x4x64xf32, #tpu.memory_space<vmem>>, vector<8x1x64xf32>,
    %18 = arith.subf %8, %10 : vector<8x64xf32>
    %cst_11 = arith.constant 2.500000e-01 : f32
    %19 = vector.broadcast %cst_11 : f32 to vector<8x64xf32>
    %20 = arith.mulf %19, %18 : vector<8x64xf32>
    %c0_12 = arith.constant 0 : index
    %c1_13 = arith.constant 1 : index
    %c0_14 = arith.constant 0 : index
    %21 = vector.load %arg2[%c0_12, %c1_13, %c0_14] : memref<8x4x64xf32, #tpu.memory_space<vmem>>, vector<8x1x64xf32>
    %22 = vector.shape_cast %21 : vector<8x1x64xf32> to vector<8x64xf32>
    %23 = vector.shape_cast %20 : vector<8x64xf32> to vector<8x1x64xf32>
    tpu.vector_store %arg2[%c0_12, %c1_13, %c0_14], %23 {strides = array<i32>} : memref<8x4x64xf32, #tpu.memory_space<vmem>>, vector<8x1x64xf32>,
    %24 = arith.addf %9, %11 : vector<8x64xf32>
    %cst_15 = arith.constant 2.500000e-01 : f32
    %25 = vector.broadcast %cst_15 : f32 to vector<8x64xf32>
    %26 = arith.mulf %25, %24 : vector<8x64xf32>
    %c0_16 = arith.constant 0 : index
    %c2_17 = arith.constant 2 : index
    %c0_18 = arith.constant 0 : index
    %27 = vector.load %arg2[%c0_16, %c2_17, %c0_18] : memref<8x4x64xf32, #tpu.memory_space<vmem>>, vector<8x1x64xf32>
    %28 = vector.shape_cast %27 : vector<8x1x64xf32> to vector<8x64xf32>
    %29 = vector.shape_cast %26 : vector<8x64xf32> to vector<8x1x64xf32>
    tpu.vector_store %arg2[%c0_16, %c2_17, %c0_18], %29 {strides = array<i32>} : memref<8x4x64xf32, #tpu.memory_space<vmem>>, vector<8x1x64xf32>,
    %30 = arith.subf %9, %11 : vector<8x64xf32>
    %cst_19 = arith.constant 2.500000e-01 : f32
    %31 = vector.broadcast %cst_19 : f32 to vector<8x64xf32>
    %32 = arith.mulf %31, %30 : vector<8x64xf32>
    %c0_20 = arith.constant 0 : index
    %c3_21 = arith.constant 3 : index
    %c0_22 = arith.constant 0 : index
    %33 = vector.load %arg2[%c0_20, %c3_21, %c0_22] : memref<8x4x64xf32, #tpu.memory_space<vmem>>, vector<8x1x64xf32>
    %34 = vector.shape_cast %33 : vector<8x1x64xf32> to vector<8x64xf32>
    %35 = vector.shape_cast %32 : vector<8x64xf32> to vector<8x1x64xf32>
    tpu.vector_store %arg2[%c0_20, %c3_21, %c0_22], %35 {strides = array<i32>} : memref<8x4x64xf32, #tpu.memory_space<vmem>>, vector<8x1x64xf32>,
    return
  }
  func.func @transform_0(%arg0: i32) -> (i32, i32, i32) {
    %c0_i32 = arith.constant 0 : i32
    %c0_i32_0 = arith.constant 0 : i32
    %c0_i32_1 = arith.constant 0 : i32
    return %c0_i32, %arg0, %c0_i32_0 : i32, i32, i32
  }
  func.func @transform_1(%arg0: i32) -> (i32, i32, i32) {
    %c0_i32 = arith.constant 0 : i32
    %c0_i32_0 = arith.constant 0 : i32
    %c0_i32_1 = arith.constant 0 : i32
    return %arg0, %c0_i32, %c0_i32_0 : i32, i32, i32
  }
}

</mosaic_0001>

<llo_original>
// kernel: tpu_custom_call.1
$region0: #{tpu_custom_call.1}
  #allocation0 [shape = 'u32[]', space=smem, size = 0x4, offset = 0x4, fixed_abs, tag = 'smem constant byte address 0x4 - core index']
  #allocation1 [shape = 'u32[144,128]{1,0:T(1,128)}', space=vmem, size = 0x12000, scoped, tag = 'internal scratch']
  %s0 = inlined_call_operand.hbm [shape: f32[4,8,64], index: 0, kind: input, shape index: {}]
  %s1 = inlined_call_operand.hbm [shape: f32[8,4,64], index: 1, kind: output, shape index: {}]
  %s2 = sld [smem:[#allocation0]]
  $region18: #{tpu_custom_call.1} parent=0
    _
  %s4 = ssub.s32 1, %s2
  %s5 = scalar_select 0, %s4, %s2
  $region1: #{tpu_custom_call.1} parent=0
    #allocation2 [shape = 'u8[16384]{0}', space=vmem, size = 0x4000, scoped, tag = 'input window, operand 0, single buffered']
    #allocation3 [shape = 's32[1]{0}', space=sflag, size = 0x4, scoped, tag = 'scoped memory for tpu_custom_call.1']
    #allocation4 [shape = 's32[1]{0}', space=sflag, size = 0x4, scoped, tag = 'scoped memory for tpu_custom_call.1']
    #allocation5 [shape = 'u8[16384]{0}', space=vmem, size = 0x4000, scoped, tag = 'output window, operand 0, single buffered']
    %6 = vsyncpa [#allocation3], 0
    %7 = vsyncpa [#allocation4], 0
    // Predicated region
    $region2: #{tpu_custom_call.1} parent=1 // pred_check
      _
    $region3: #{tpu_custom_call.1} parent=1 // pred_check_branch
      %9 = sbr.rel (0) target = $region5
    $region4: #{tpu_custom_call.1} parent=1 // pred_region
      %s11 = ssub.s32 512, 512
      %12 = vsyncadd [#allocation3], %s11
      %s13 = sshll.u32 [#allocation2], 4
      %s14 = int_to_ptr.vmem [resolvable:$true] %s13
      %19 = dma.hbm_to_vmem [thread:$0]  %s0, 512, %s14, [#allocation3], 128, 128, 8
    $region5: #{tpu_custom_call.1} parent=1 // pred_fallthru
      _
    // Predicated region
    $region6: #{tpu_custom_call.1} parent=1 // pred_check
      _
    $region7: #{tpu_custom_call.1} parent=1 // pred_check_branch
      %21 = sbr.rel (0) target = $region9
    $region8: #{tpu_custom_call.1} parent=1 // pred_region
      %22 = dma.done [#allocation3], 512
    $region9: #{tpu_custom_call.1} parent=1 // pred_fallthru
      _
    %v23 = vld [vmem:[#allocation2] sm:$0xff]
    %s24 = scalar_lea.vmem [#allocation2], 8
    %v25 = vld [vmem:[%s24] sm:$0xff]
    %s26 = scalar_lea.vmem [#allocation2], 16
    %v27 = vld [vmem:[%s26] sm:$0xff]
    %s28 = scalar_lea.vmem [#allocation2], 24
    %v29 = vld [vmem:[%s28] sm:$0xff]
    %v30 = vadd.f32 %v23, %v25
    %v31 = vsub.f32 %v23, %v25
    %v32 = vadd.f32 %v27, %v29
    %v33 = vsub.f32 %v27, %v29
    %v34 = vadd.f32 %v30, %v32
    %v35 = vmul.f32 %v34, 0.25
    %v37 = vcombine.high %v35, %v35
    %v39 = vunpack.c.l.s4 1966171168
    %v40 = vunpack.c.0.s8 %v39
    %v41 = vlaneseq
    %v42 = vshrl.u32 %v41, 7
    %v43 = vsub.s32 %v40, %v42
    %v44 = vrot.slane %v35, %v43
    %v46 = vunpack.c.l.s4 1966171168
    %v47 = vunpack.c.0.s8 %v46
    %v48 = vlaneseq
    %v49 = vshrl.u32 %v48, 7
    %v50 = vsub.s32 %v47, %v49
    %v51 = vrot.slane %v37, %v50
    %v52 = vcombine.high %v44, %v44
    %v53 = vcombine.high %v51, %v51
    %v55 = vunpack.c.l.s4 1966171168
    %v56 = vunpack.c.0.s8 %v55
    %v57 = vlaneseq
    %v58 = vshrl.u32 %v57, 7
    %v59 = vsub.s32 %v56, %v58
    %v60 = vrot.slane %v44, %v59
    %v62 = vunpack.c.l.s4 1966171168
    %v63 = vunpack.c.0.s8 %v62
    %v64 = vlaneseq
    %v65 = vshrl.u32 %v64, 7
    %v66 = vsub.s32 %v63, %v65
    %v67 = vrot.slane %v51, %v66
    %v69 = vunpack.c.l.s4 1966171168
    %v70 = vunpack.c.0.s8 %v69
    %v71 = vlaneseq
    %v72 = vshrl.u32 %v71, 7
    %v73 = vsub.s32 %v70, %v72
    %v74 = vrot.slane %v52, %v73
    %v76 = vunpack.c.l.s4 1966171168
    %v77 = vunpack.c.0.s8 %v76
    %v78 = vlaneseq
    %v79 = vshrl.u32 %v78, 7
    %v80 = vsub.s32 %v77, %v79
    %v81 = vrot.slane %v53, %v80
    %v82 = vcombine.high %v60, %v60
    %v83 = vcombine.high %v67, %v67
    %v84 = vcombine.high %v74, %v74
    %v85 = vcombine.high %v81, %v81
    %vm94 = vcmask 516096
    %95 = vst.msk [vmem:[#allocation5] sm:$0x1] %vm94, %v60
    %96 = vst.msk [vmem:[#allocation5 + $0x4] sm:$0x1] %vm94, %v74
    %97 = vst.msk [vmem:[#allocation5 + $0x8] sm:$0x1] %vm94, %v82
    %98 = vst.msk [vmem:[#allocation5 + $0xc] sm:$0x1] %vm94, %v84
    %99 = vst.msk [vmem:[#allocation5 + $0x10] sm:$0x1] %vm94, %v67
    %100 = vst.msk [vmem:[#allocation5 + $0x14] sm:$0x1] %vm94, %v81
    %101 = vst.msk [vmem:[#allocation5 + $0x18] sm:$0x1] %vm94, %v83
    %102 = vst.msk [vmem:[#allocation5 + $0x1c] sm:$0x1] %vm94, %v85
    %v103 = vsub.f32 %v30, %v32
    %v104 = vmul.f32 %v103, 0.25
    %v106 = vcombine.high %v104, %v104
    %v108 = vunpack.c.l.s4 1966171168
    %v109 = vunpack.c.0.s8 %v108
    %v110 = vlaneseq
    %v111 = vshrl.u32 %v110, 7
    %v112 = vsub.s32 %v109, %v111
    %v113 = vrot.slane %v104, %v112
    %v115 = vunpack.c.l.s4 1966171168
    %v116 = vunpack.c.0.s8 %v115
    %v117 = vlaneseq
    %v118 = vshrl.u32 %v117, 7
    %v119 = vsub.s32 %v116, %v118
    %v120 = vrot.slane %v106, %v119
    %v121 = vcombine.high %v113, %v113
    %v122 = vcombine.high %v120, %v120
    %v124 = vunpack.c.l.s4 1966171168
    %v125 = vunpack.c.0.s8 %v124
    %v126 = vlaneseq
    %v127 = vshrl.u32 %v126, 7
    %v128 = vsub.s32 %v125, %v127
    %v129 = vrot.slane %v113, %v128
    %v131 = vunpack.c.l.s4 1966171168
    %v132 = vunpack.c.0.s8 %v131
    %v133 = vlaneseq
    %v134 = vshrl.u32 %v133, 7
    %v135 = vsub.s32 %v132, %v134
    %v136 = vrot.slane %v120, %v135
    %v138 = vunpack.c.l.s4 1966171168
    %v139 = vunpack.c.0.s8 %v138
    %v140 = vlaneseq
    %v141 = vshrl.u32 %v140, 7
    %v142 = vsub.s32 %v139, %v141
    %v143 = vrot.slane %v121, %v142
    %v145 = vunpack.c.l.s4 1966171168
    %v146 = vunpack.c.0.s8 %v145
    %v147 = vlaneseq
    %v148 = vshrl.u32 %v147, 7
    %v149 = vsub.s32 %v146, %v148
    %v150 = vrot.slane %v122, %v149
    %v151 = vcombine.high %v129, %v129
    %v152 = vcombine.high %v136, %v136
    %v153 = vcombine.high %v143, %v143
    %v154 = vcombine.high %v150, %v150
    %163 = vst.msk [vmem:[#allocation5 + $0x1] sm:$0x1] %vm94, %v129
    %164 = vst.msk [vmem:[#allocation5 + $0x5] sm:$0x1] %vm94, %v143
    %165 = vst.msk [vmem:[#allocation5 + $0x9] sm:$0x1] %vm94, %v151
    %166 = vst.msk [vmem:[#allocation5 + $0xd] sm:$0x1] %vm94, %v153
    %167 = vst.msk [vmem:[#allocation5 + $0x11] sm:$0x1] %vm94, %v136
    %168 = vst.msk [vmem:[#allocation5 + $0x15] sm:$0x1] %vm94, %v150
    %169 = vst.msk [vmem:[#allocation5 + $0x19] sm:$0x1] %vm94, %v152
    %170 = vst.msk [vmem:[#allocation5 + $0x1d] sm:$0x1] %vm94, %v154
    %v171 = vadd.f32 %v31, %v33
    %v172 = vmul.f32 %v171, 0.25
    %v174 = vcombine.high %v172, %v172
    %v176 = vunpack.c.l.s4 1966171168
    %v177 = vunpack.c.0.s8 %v176
    %v178 = vlaneseq
    %v179 = vshrl.u32 %v178, 7
    %v180 = vsub.s32 %v177, %v179
    %v181 = vrot.slane %v172, %v180
    %v183 = vunpack.c.l.s4 1966171168
    %v184 = vunpack.c.0.s8 %v183
    %v185 = vlaneseq
    %v186 = vshrl.u32 %v185, 7
    %v187 = vsub.s32 %v184, %v186
    %v188 = vrot.slane %v174, %v187
    %v189 = vcombine.high %v181, %v181
    %v190 = vcombine.high %v188, %v188
    %v192 = vunpack.c.l.s4 1966171168
    %v193 = vunpack.c.0.s8 %v192
    %v194 = vlaneseq
    %v195 = vshrl.u32 %v194, 7
    %v196 = vsub.s32 %v193, %v195
    %v197 = vrot.slane %v181, %v196
    %v199 = vunpack.c.l.s4 1966171168
    %v200 = vunpack.c.0.s8 %v199
    %v201 = vlaneseq
    %v202 = vshrl.u32 %v201, 7
    %v203 = vsub.s32 %v200, %v202
    %v204 = vrot.slane %v188, %v203
    %v206 = vunpack.c.l.s4 1966171168
    %v207 = vunpack.c.0.s8 %v206
    %v208 = vlaneseq
    %v209 = vshrl.u32 %v208, 7
    %v210 = vsub.s32 %v207, %v209
    %v211 = vrot.slane %v189, %v210
    %v213 = vunpack.c.l.s4 1966171168
    %v214 = vunpack.c.0.s8 %v213
    %v215 = vlaneseq
    %v216 = vshrl.u32 %v215, 7
    %v217 = vsub.s32 %v214, %v216
    %v218 = vrot.slane %v190, %v217
    %v219 = vcombine.high %v197, %v197
    %v220 = vcombine.high %v204, %v204
    %v221 = vcombine.high %v211, %v211
    %v222 = vcombine.high %v218, %v218
    %231 = vst.msk [vmem:[#allocation5 + $0x2] sm:$0x1] %vm94, %v197
    %232 = vst.msk [vmem:[#allocation5 + $0x6] sm:$0x1] %vm94, %v211
    %233 = vst.msk [vmem:[#allocation5 + $0xa] sm:$0x1] %vm94, %v219
    %234 = vst.msk [vmem:[#allocation5 + $0xe] sm:$0x1] %vm94, %v221
    %235 = vst.msk [vmem:[#allocation5 + $0x12] sm:$0x1] %vm94, %v204
    %236 = vst.msk [vmem:[#allocation5 + $0x16] sm:$0x1] %vm94, %v218
    %237 = vst.msk [vmem:[#allocation5 + $0x1a] sm:$0x1] %vm94, %v220
    %238 = vst.msk [vmem:[#allocation5 + $0x1e] sm:$0x1] %vm94, %v222
    %v239 = vsub.f32 %v31, %v33
    %v240 = vmul.f32 %v239, 0.25
    %v242 = vcombine.high %v240, %v240
    %v244 = vunpack.c.l.s4 1966171168
    %v245 = vunpack.c.0.s8 %v244
    %v246 = vlaneseq
    %v247 = vshrl.u32 %v246, 7
    %v248 = vsub.s32 %v245, %v247
    %v249 = vrot.slane %v240, %v248
    %v251 = vunpack.c.l.s4 1966171168
    %v252 = vunpack.c.0.s8 %v251
    %v253 = vlaneseq
    %v254 = vshrl.u32 %v253, 7
    %v255 = vsub.s32 %v252, %v254
    %v256 = vrot.slane %v242, %v255
    %v257 = vcombine.high %v249, %v249
    %v258 = vcombine.high %v256, %v256
    %v260 = vunpack.c.l.s4 1966171168
    %v261 = vunpack.c.0.s8 %v260
    %v262 = vlaneseq
    %v263 = vshrl.u32 %v262, 7
    %v264 = vsub.s32 %v261, %v263
    %v265 = vrot.slane %v249, %v264
    %v267 = vunpack.c.l.s4 1966171168
    %v268 = vunpack.c.0.s8 %v267
    %v269 = vlaneseq
    %v270 = vshrl.u32 %v269, 7
    %v271 = vsub.s32 %v268, %v270
    %v272 = vrot.slane %v256, %v271
    %v274 = vunpack.c.l.s4 1966171168
    %v275 = vunpack.c.0.s8 %v274
    %v276 = vlaneseq
    %v277 = vshrl.u32 %v276, 7
    %v278 = vsub.s32 %v275, %v277
    %v279 = vrot.slane %v257, %v278
    %v281 = vunpack.c.l.s4 1966171168
    %v282 = vunpack.c.0.s8 %v281
    %v283 = vlaneseq
    %v284 = vshrl.u32 %v283, 7
    %v285 = vsub.s32 %v282, %v284
    %v286 = vrot.slane %v258, %v285
    %v287 = vcombine.high %v265, %v265
    %v288 = vcombine.high %v272, %v272
    %v289 = vcombine.high %v279, %v279
    %v290 = vcombine.high %v286, %v286
    %299 = vst.msk [vmem:[#allocation5 + $0x3] sm:$0x1] %vm94, %v265
    %300 = vst.msk [vmem:[#allocation5 + $0x7] sm:$0x1] %vm94, %v279
    %301 = vst.msk [vmem:[#allocation5 + $0xb] sm:$0x1] %vm94, %v287
    %302 = vst.msk [vmem:[#allocation5 + $0xf] sm:$0x1] %vm94, %v289
    %303 = vst.msk [vmem:[#allocation5 + $0x13] sm:$0x1] %vm94, %v272
    %304 = vst.msk [vmem:[#allocation5 + $0x17] sm:$0x1] %vm94, %v286
    %305 = vst.msk [vmem:[#allocation5 + $0x1b] sm:$0x1] %vm94, %v288
    %306 = vst.msk [vmem:[#allocation5 + $0x1f] sm:$0x1] %vm94, %v290
    // Predicated region
    $region10: #{tpu_custom_call.1} parent=1 // pred_check
      _
    $region11: #{tpu_custom_call.1} parent=1 // pred_check_branch
      %308 = sbr.rel (0) target = $region13
    $region12: #{tpu_custom_call.1} parent=1 // pred_region
      %s310 = ssub.s32 512, 512
      %311 = vsyncadd [#allocation4], %s310
      %s312 = sshll.u32 [#allocation5], 4
      %s313 = int_to_ptr.vmem [resolvable:$true] %s312
      %318 = dma.vmem_to_hbm [thread:$0]  %s313, 512, %s1, [#allocation4], 64, 64, 4
    $region13: #{tpu_custom_call.1} parent=1 // pred_fallthru
      _
    // Predicated region
    $region14: #{tpu_custom_call.1} parent=1 // pred_check
      _
    $region15: #{tpu_custom_call.1} parent=1 // pred_check_branch
      %320 = sbr.rel (0) target = $region17
    $region16: #{tpu_custom_call.1} parent=1 // pred_region
      %321 = dma.done [#allocation4], 512
    $region17: #{tpu_custom_call.1} parent=1 // pred_fallthru
      _
    %322 = vsyncpa [#allocation3], 1
    %323 = vsyncpa [#allocation4], 1

</llo_original>
